<compile_context>
chip_gen: v7x
topology: tpu7x:2x2x1
jax: 0.10.0
libtpu: 0.0.40
codegen_flags: <defaults>
</compile_context>

<pallas_src>
import functools

import jax
import jax.numpy as jnp
from jax import lax
from jax.experimental import pallas as pl
from jax.experimental.pallas import tpu as pltpu

N_EMBD = 128        # matches the PyTorch module's n_embd
BLOCK_SIZE = 256    # matches the PyTorch module's block_size (upper bound on T)


def _head_kernel(x_ref, wqkv_ref, o_ref, *, head_size):
    # x_ref: (Bt, T, C) f32, wqkv_ref: (C, 3H) bf16, o_ref: (Bt, H, T) f32 (transposed!)
    Bt, T, C = x_ref.shape
    H = head_size

    # Fused QKV projection: one 2-D MXU matmul (Bt*T, C) @ (C, 3H), bf16 in / f32 acc.
    x2d = x_ref[...].reshape(Bt * T, C).astype(jnp.bfloat16)
    qkv = jnp.dot(x2d, wqkv_ref[...], preferred_element_type=jnp.float32)
    qkv = qkv.reshape(Bt, T, 3 * H)

    scale = jnp.float32(C) ** jnp.float32(-0.5)   # PyTorch scales by C**-0.5 (C = n_embd)
    q = (qkv[..., 0 * H:1 * H] * scale).astype(jnp.bfloat16)  # scale on q: T*H muls
    k = qkv[..., 1 * H:2 * H].astype(jnp.bfloat16)
    v = qkv[..., 2 * H:3 * H].astype(jnp.bfloat16)

    # q @ k^T without materializing a transpose: contract last axes, batch on dim 0.
    wei = lax.dot_general(
        q, k, dimension_numbers=(((2,), (2,)), ((0,), (0,))),
        preferred_element_type=jnp.float32)       # (Bt, T, T) f32

    # Causal mask built in-kernel (no HBM tril buffer; cheap int compare on the VPU).
    row = lax.broadcasted_iota(jnp.int32, (T, T), 0)
    col = lax.broadcasted_iota(jnp.int32, (T, T), 1)
    wei = jnp.where((col <= row)[None, :, :], wei, -jnp.inf)

    # Numerically-stable softmax along the last axis (f32; diagonal always unmasked).
    m = jnp.max(wei, axis=-1, keepdims=True)
    e = jnp.exp(wei - m)
    s = jnp.sum(e, axis=-1, keepdims=True)
    p = (e * pl.reciprocal(s, approx=True)).astype(jnp.bfloat16)   # EUP slot, frees VALU

    # Transposed final product -> (Bt, H, T): lane-dense output store when T % 128 == 0.
    out_t = lax.dot_general(
        v, p, dimension_numbers=(((1,), (2,)), ((0,), (0,))),
        preferred_element_type=jnp.float32)       # (Bt, H, T)
    o_ref[...] = out_t.astype(o_ref.dtype)


def _vmem_bytes_per_step(bt, T, C, H):
    """Rough per-grid-step VMEM live-set estimate (tiles double-buffered)."""
    f32, bf16 = 4, 2
    x_tiles = 2 * bt * T * C * f32                  # double-buffered input tile
    o_tiles = 2 * bt * H * T * f32                  # double-buffered output tile
    w_tiles = 2 * C * 3 * H * bf16                  # fused weight
    inter = bt * (T * C * bf16                      # x in bf16
                  + T * 3 * H * (f32 + bf16)        # qkv f32 + q/k/v bf16
                  + 3 * T * T * f32                 # wei / e / p
                  + T * T * bf16)                   # p bf16
    return x_tiles + o_tiles + w_tiles + inter


def head_forward(x, wq, wk, wv, *, batch_tile=None):
    """x: (B, T, C) float32; wq/wk/wv: (C, H) float32. Returns (B, T, H) float32."""
    B, T, C = x.shape
    H = wq.shape[1]
    assert C == N_EMBD and T <= BLOCK_SIZE

    if batch_tile is None:
        # >=2 grid steps when B>=2 (feeds both v7x TensorCores), cap at 16 so the
        # per-step live set stays well inside v7x's 64 MiB VMEM (and v5e/v6e's 128 MiB)
        # while still amortizing the ~0.35us per-grid-step overhead.
        batch_tile = min(16, max(1, pl.cdiv(B, 2)))
    grid_b = pl.cdiv(B, batch_tile)
    B_pad = grid_b * batch_tile
    x_p = x if B_pad == B else jnp.pad(x, ((0, B_pad - B), (0, 0), (0, 0)))

    # Fuse the three projection weights into one (C, 3H) bf16 matrix (once per call).
    w_qkv = jnp.concatenate([wq, wk, wv], axis=1).astype(jnp.bfloat16)

    cost = pl.CostEstimate(
        flops=2 * B_pad * T * C * 3 * H + 4 * B_pad * T * T * H,
        transcendentals=B_pad * T * T,
        bytes_accessed=B_pad * T * C * 4 + C * 3 * H * 2 + B_pad * T * H * 4,
    )
    vmem_limit = int(min(max(32 << 20, int(1.3 * _vmem_bytes_per_step(batch_tile, T, C, H))),
                         64 << 20))

    kernel = functools.partial(_head_kernel, head_size=H)
    out_ht = pl.pallas_call(
        kernel,
        out_shape=jax.ShapeDtypeStruct((B_pad, H, T), x.dtype),   # transposed layout
        grid_spec=pltpu.PrefetchScalarGridSpec(
            num_scalar_prefetch=0,
            grid=(grid_b,),
            in_specs=[
                pl.BlockSpec((batch_tile, T, C), lambda b: (b, 0, 0)),  # x batch tile
                pl.BlockSpec((C, 3 * H), lambda b: (0, 0)),             # fused Wqkv (shared)
            ],
            out_specs=pl.BlockSpec((batch_tile, H, T), lambda b: (b, 0, 0)),
        ),
        compiler_params=pltpu.CompilerParams(
            dimension_semantics=("parallel",),
            vmem_limit_bytes=vmem_limit,
        ),
        cost_estimate=cost,
    )(x_p, w_qkv)

    out = jnp.swapaxes(out_ht, 1, 2)   # (B_pad, T, H): cheap wrapper-side layout plumbing
    return out[:B] if B_pad != B else out


def head_reference(x, wq, wk, wv):
    """Pure-JAX reference mirroring the PyTorch forward (eval mode)."""
    B, T, C = x.shape
    q = x @ wq
    k = x @ wk
    v = x @ wv
    wei = (q @ jnp.swapaxes(k, -1, -2)) * (C ** -0.5)
    mask = jnp.tril(jnp.ones((T, T)))
    wei = jnp.where(mask == 0, -jnp.inf, wei)
    wei = jax.nn.softmax(wei, axis=-1)
    return wei @ v


if __name__ == "__main__":
    key = jax.random.PRNGKey(0)
    C, HEAD_SIZE = N_EMBD, 32

    kq, kk, kv, kx1, kx2 = jax.random.split(key, 5)
    # nn.Linear(n_embd, head_size, bias=False) weight is (head_size, n_embd);
    # we store the transpose (C, H) so the kernel computes x @ W directly.
    bound = 1.0 / (C ** 0.5)
    wq = jax.random.uniform(kq, (C, HEAD_SIZE), jnp.float32, -bound, bound)
    wk = jax.random.uniform(kk, (C, HEAD_SIZE), jnp.float32, -bound, bound)
    wv = jax.random.uniform(kv, (C, HEAD_SIZE), jnp.float32, -bound, bound)

    # Case 1: small canonical shape (B=2, T=16) -> batch_tile=1, grid=(2,).
    x1 = jax.random.normal(kx1, (2, 16, C), dtype=jnp.float32)
    out1 = head_forward(x1, wq, wk, wv)
    jax.block_until_ready(out1)
    ref1 = head_reference(x1, wq, wk, wv)
    assert out1.shape == (2, 16, HEAD_SIZE)
    # bf16 MXU operands (f32 accumulation) + approx reciprocal: tolerance loosened to 2e-2.
    assert jnp.allclose(out1, ref1, atol=2e-2, rtol=2e-2), float(jnp.max(jnp.abs(out1 - ref1)))

    # Case 2: odd batch (exercises cdiv grid + batch padding) at a longer T.
    x2 = jax.random.normal(kx2, (3, 64, C), dtype=jnp.float32)
    out2 = head_forward(x2, wq, wk, wv)
    jax.block_until_ready(out2)
    ref2 = head_reference(x2, wq, wk, wv)
    assert out2.shape == (3, 64, HEAD_SIZE)
    assert jnp.allclose(out2, ref2, atol=2e-2, rtol=2e-2), float(jnp.max(jnp.abs(out2 - ref2)))

    print("KERNEL_OK")
</pallas_src>

<mosaic_0001>
module attributes {stable_mosaic.version = 11 : i64} {
  func.func @_head_kernel(%arg0: i32, %arg1: memref<1x16x128xf32, #tpu.memory_space<vmem>>, %arg2: memref<128x96xbf16, #tpu.memory_space<vmem>>, %arg3: memref<1x32x16xf32, #tpu.memory_space<vmem>>) attributes {dimension_semantics = [#tpu.dimension_semantics<parallel>], iteration_bounds = array<i64: 2>, scalar_prefetch = 0 : i64, scratch_operands = 0 : i64, tpu.core_type = #tpu.core_type<tc>, window_params = [{transform_indices = @transform_0, window_bounds = array<i64: 1, 16, 128>}, {pipeline_mode = #tpu.pipeline_mode<synchronous>, transform_indices = @transform_1, window_bounds = array<i64: 128, 96>}, {transform_indices = @transform_2, window_bounds = array<i64: 1, 32, 16>}]} {
    %c0 = arith.constant 0 : index
    %c0_0 = arith.constant 0 : index
    %c0_1 = arith.constant 0 : index
    %0 = vector.load %arg1[%c0, %c0_0, %c0_1] : memref<1x16x128xf32, #tpu.memory_space<vmem>>, vector<1x16x128xf32>
    %1 = vector.shape_cast %0 : vector<1x16x128xf32> to vector<16x128xf32>
    %2 = arith.truncf %1 : vector<16x128xf32> to vector<16x128xbf16>
    %c0_2 = arith.constant 0 : index
    %c0_3 = arith.constant 0 : index
    %3 = vector.load %arg2[%c0_2, %c0_3] : memref<128x96xbf16, #tpu.memory_space<vmem>>, vector<128x96xbf16>
    %cst = arith.constant dense<0.000000e+00> : vector<16x96xf32>
    %4 = tpu.matmul %2, %3, %cst {dimension_numbers = #tpu.dot_dimension_numbers<[1], [0], [0], [1], [0, 0, 1, 1], [], []>} : vector<16x128xbf16>, vector<128x96xbf16>, vector<16x96xf32> -> vector<16x96xf32>
    %5 = vector.shape_cast %4 : vector<16x96xf32> to vector<1x16x96xf32>
    %cst_4 = arith.constant 1.280000e+02 : f32
    %cst_5 = arith.constant -5.000000e-01 : f32
    %6 = math.powf %cst_4, %cst_5 : f32
    %7 = vector.extract_strided_slice %5 {offsets = [0, 0, 0], sizes = [1, 16, 32], strides = [1, 1, 1]} : vector<1x16x96xf32> to vector<1x16x32xf32>
    %8 = vector.broadcast %6 : f32 to vector<1x16x32xf32>
    %9 = arith.mulf %7, %8 : vector<1x16x32xf32>
    %10 = arith.truncf %9 : vector<1x16x32xf32> to vector<1x16x32xbf16>
    %11 = vector.extract_strided_slice %5 {offsets = [0, 0, 32], sizes = [1, 16, 32], strides = [1, 1, 1]} : vector<1x16x96xf32> to vector<1x16x32xf32>
    %12 = arith.truncf %11 : vector<1x16x32xf32> to vector<1x16x32xbf16>
    %13 = vector.extract_strided_slice %5 {offsets = [0, 0, 64], sizes = [1, 16, 32], strides = [1, 1, 1]} : vector<1x16x96xf32> to vector<1x16x32xf32>
    %14 = arith.truncf %13 : vector<1x16x32xf32> to vector<1x16x32xbf16>
    %cst_6 = arith.constant dense<0.000000e+00> : vector<1x16x16xf32>
    %15 = tpu.matmul %10, %12, %cst_6 {dimension_numbers = #tpu.dot_dimension_numbers<[2], [2], [1], [1], [0, 0, 0, 1, 1, 1], [0], [0]>} : vector<1x16x32xbf16>, vector<1x16x32xbf16>, vector<1x16x16xf32> -> vector<1x16x16xf32>
    %16 = tpu.iota {dimensions = array<i32: 0>} : vector<16x16xi32>
    %17 = tpu.iota {dimensions = array<i32: 1>} : vector<16x16xi32>
    %18 = arith.cmpi sle, %17, %16 : vector<16x16xi32>
    %19 = vector.shape_cast %18 : vector<16x16xi1> to vector<1x16x16xi1>
    %cst_7 = arith.constant 0xFF800000 : f32
    %20 = vector.broadcast %cst_7 : f32 to vector<1x16x16xf32>
    %21 = arith.select %19, %15, %20 : vector<1x16x16xi1>, vector<1x16x16xf32>
    %cst_8 = arith.constant dense<0xFF800000> : vector<1x16xf32>
    %22 = vector.multi_reduction <maximumf>, %21, %cst_8 [2] : vector<1x16x16xf32> to vector<1x16xf32>
    %23 = vector.shape_cast %22 : vector<1x16xf32> to vector<1x16x1xf32>
    %24 = vector.broadcast %23 : vector<1x16x1xf32> to vector<1x16x16xf32>
    %25 = arith.subf %21, %24 : vector<1x16x16xf32>
    %26 = math.exp %25 : vector<1x16x16xf32>
    %cst_9 = arith.constant dense<0.000000e+00> : vector<1x16xf32>
    %27 = vector.multi_reduction <add>, %26, %cst_9 [2] : vector<1x16x16xf32> to vector<1x16xf32>
    %28 = vector.shape_cast %27 : vector<1x16xf32> to vector<1x16x1xf32>
    %29 = tpu.reciprocal %28 {approx = true} : vector<1x16x1xf32> -> vector<1x16x1xf32>
    %30 = vector.broadcast %29 : vector<1x16x1xf32> to vector<1x16x16xf32>
    %31 = arith.mulf %26, %30 : vector<1x16x16xf32>
    %32 = arith.truncf %31 : vector<1x16x16xf32> to vector<1x16x16xbf16>
    %cst_10 = arith.constant dense<0.000000e+00> : vector<1x32x16xf32>
    %33 = tpu.matmul %14, %32, %cst_10 {dimension_numbers = #tpu.dot_dimension_numbers<[1], [2], [2], [1], [0, 0, 0, 2, 1, 1], [0], [0]>} : vector<1x16x32xbf16>, vector<1x16x16xbf16>, vector<1x32x16xf32> -> vector<1x32x16xf32>
    %c0_11 = arith.constant 0 : index
    %c0_12 = arith.constant 0 : index
    %c0_13 = arith.constant 0 : index
    %34 = vector.load %arg3[%c0_11, %c0_12, %c0_13] : memref<1x32x16xf32, #tpu.memory_space<vmem>>, vector<1x32x16xf32>
    tpu.vector_store %arg3[%c0_11, %c0_12, %c0_13], %33 {strides = array<i32>} : memref<1x32x16xf32, #tpu.memory_space<vmem>>, vector<1x32x16xf32>,
    return
  }
  func.func @transform_0(%arg0: i32) -> (i32, i32, i32) {
    %c0_i32 = arith.constant 0 : i32
    %c0_i32_0 = arith.constant 0 : i32
    %c0_i32_1 = arith.constant 0 : i32
    return %arg0, %c0_i32, %c0_i32_0 : i32, i32, i32
  }
  func.func @transform_1(%arg0: i32) -> (i32, i32) {
    %c0_i32 = arith.constant 0 : i32
    %c0_i32_0 = arith.constant 0 : i32
    %c0_i32_1 = arith.constant 0 : i32
    return %c0_i32, %c0_i32_0 : i32, i32
  }
  func.func @transform_2(%arg0: i32) -> (i32, i32, i32) {
    %c0_i32 = arith.constant 0 : i32
    %c0_i32_0 = arith.constant 0 : i32
    %c0_i32_1 = arith.constant 0 : i32
    return %arg0, %c0_i32, %c0_i32_0 : i32, i32, i32
  }
}

</mosaic_0001>

<llo_original>
// kernel: tpu_custom_call.1
$region0: #{tpu_custom_call.1}
  #allocation0 [shape = 'u32[]', space=smem, size = 0x4, offset = 0x4, fixed_abs, tag = 'smem constant byte address 0x4 - core index']
  #allocation1 [shape = 'u32[144,128]{1,0:T(1,128)}', space=vmem, size = 0x12000, scoped, tag = 'internal scratch']
  %s0 = inlined_call_operand.vmem [shape: f32[2,16,128], index: 0, kind: input, shape index: {}]
  %s1 = inlined_call_operand.vmem [shape: bf16[128,96], index: 1, kind: input, shape index: {}]
  %s2 = inlined_call_operand.vmem [shape: f32[2,32,16], index: 2, kind: output, shape index: {}]
  %s3 = sld [smem:[#allocation0]]
  $region41: #{tpu_custom_call.1} parent=0
    _
  %s5 = ssub.s32 1, %s3
  %s6 = scalar_select 0, %s5, %s3
  loop: start=0, step=1, limit=4
  $region2: #{tpu_custom_call.1} parent=0 // loop_pre_header
    _
  $region3: #{tpu_custom_call.1} parent=0 // loop_header
    %s8 = sphi 0, %s12
    %p9 = scmp.ge.s32.totalorder %s8, 4
    %s18 = sphi 0, %s20
    %s21 = sphi 0, %s18
    %s22 = sphi 0, %s21
    %s38 = sphi 0, %s22
    %s42 = sphi 0, %s42
    %s44 = sphi 0, %s42
    %s45 = sphi 0, %s44
    %s59 = sphi 0, %s45
    %s65 = sphi 0, %s67
    %s68 = sphi 0, %s65
    %s69 = sphi 0, %s68
    %s85 = sphi 0, %s69
  $region4: #{tpu_custom_call.1} parent=0 // loop_header_branch
    %11 = sbr.rel (%p9) target = $region8
  $region5: #{tpu_custom_call.1} parent=0 // loop_body
    %s13 = ssub.s32 %s8, 1
    %s14 = ssub.s32 %s8, 2
    %s15 = sadd.s32 %s8, 1
    %s16 = ssub.s32 %s8, %s15
    %p17 = scmp.eq.s32.totalorder %s16, 0
    %s19 = sadd.s32 %s18, 1
    %s20 = scalar_select %p17, %s18, %s19
    %p23 = pneg %p17
    %p24 = scmp.eq.s32.totalorder %s8, 1
    %p25 = por %p23, %p24
    %p26 = scmp.ne.s32.totalorder %s18, %s21
    %p27 = scmp.eq.s32.totalorder %s8, 0
    %p28 = por %p26, %p27
    %p29 = scmp.ne.s32.totalorder %s18, %s21
    %p30 = scmp.eq.s32.totalorder %s13, 1
    %p31 = por %p29, %p30
    %p32 = scmp.ne.s32.totalorder %s21, %s22
    %p33 = scmp.eq.s32.totalorder %s13, 0
    %p34 = por %p32, %p33
    %p35 = scmp.ne.s32.totalorder %s21, %s22
    %p36 = scmp.eq.s32.totalorder %s14, 1
    %p37 = por %p35, %p36
    %p39 = scmp.ne.s32.totalorder %s22, %s38
    %p40 = scmp.eq.s32.totalorder %s14, 0
    %p41 = por %p39, %p40
    %s43 = sadd.s32 %s42, 1
    %p46 = scmp.eq.s32.totalorder %s8, 1
    %p47 = scmp.ne.s32.totalorder %s42, %s44
    %p48 = scmp.eq.s32.totalorder %s8, 0
    %p49 = por %p47, %p48
    %p50 = scmp.ne.s32.totalorder %s42, %s44
    %p51 = scmp.eq.s32.totalorder %s13, 1
    %p52 = por %p50, %p51
    %p53 = scmp.ne.s32.totalorder %s44, %s45
    %p54 = scmp.eq.s32.totalorder %s13, 0
    %p55 = por %p53, %p54
    %p56 = scmp.ne.s32.totalorder %s44, %s45
    %p57 = scmp.eq.s32.totalorder %s14, 1
    %p58 = por %p56, %p57
    %p60 = scmp.ne.s32.totalorder %s45, %s59
    %p61 = scmp.eq.s32.totalorder %s14, 0
    %p62 = por %p60, %p61
    %s63 = ssub.s32 %s8, %s15
    %p64 = scmp.eq.s32.totalorder %s63, 0
    %s66 = sadd.s32 %s65, 1
    %s67 = scalar_select %p64, %s65, %s66
    %p70 = pneg %p64
    %p71 = scmp.eq.s32.totalorder %s8, 1
    %p72 = por %p70, %p71
    %p73 = scmp.ne.s32.totalorder %s65, %s68
    %p74 = scmp.eq.s32.totalorder %s8, 0
    %p75 = por %p73, %p74
    %p76 = scmp.ne.s32.totalorder %s65, %s68
    %p77 = scmp.eq.s32.totalorder %s13, 1
    %p78 = por %p76, %p77
    %p79 = scmp.ne.s32.totalorder %s68, %s69
    %p80 = scmp.eq.s32.totalorder %s13, 0
    %p81 = por %p79, %p80
    %p82 = scmp.ne.s32.totalorder %s68, %s69
    %p83 = scmp.eq.s32.totalorder %s14, 1
    %p84 = por %p82, %p83
    %p86 = scmp.ne.s32.totalorder %s69, %s85
    %p87 = scmp.eq.s32.totalorder %s14, 0
    %p88 = por %p86, %p87
    %p89 = scmp.le.s32.totalorder 1, %s8
    %p90 = scmp.lt.s32.totalorder %s8, 3
    %p91 = pnand %p89, %p90
    %p92 = pneg %p91
    // Predicated region
    $region9: #{tpu_custom_call.1} parent=5 // pred_check
      _
    $region10: #{tpu_custom_call.1} parent=5 // pred_check_branch
      %94 = sbr.rel (%p91) target = $region12
    $region11: #{tpu_custom_call.1} parent=5 // pred_region
      %s95 = ssub.s32 %s8, 1
      // Predicated region
      $region13: #{tpu_custom_call.1} parent=11 // pred_check
        %p96 = pneg %p55
      $region14: #{tpu_custom_call.1} parent=11 // pred_check_branch
        %98 = sbr.rel (%p96) target = $region16
      $region15: #{tpu_custom_call.1} parent=11 // pred_region
        _
      $region16: #{tpu_custom_call.1} parent=11 // pred_fallthru
        _
    $region12: #{tpu_custom_call.1} parent=5 // pred_fallthru
      _
    %p99 = scmp.lt.s32.totalorder %s8, 2
    // Predicated region
    $region17: #{tpu_custom_call.1} parent=5 // pred_check
      %p100 = pneg %p99
    $region18: #{tpu_custom_call.1} parent=5 // pred_check_branch
      %102 = sbr.rel (%p100) target = $region20
    $region19: #{tpu_custom_call.1} parent=5 // pred_region
      // Predicated region
      $region21: #{tpu_custom_call.1} parent=19 // pred_check
        %p103 = pneg %p28
      $region22: #{tpu_custom_call.1} parent=19 // pred_check_branch
        %105 = sbr.rel (%p103) target = $region24
      $region23: #{tpu_custom_call.1} parent=19 // pred_region
        %p106 = scmp.lt.s32.totalorder %s8, 1
        %s107 = scalar_select %p106, %s8, 1
        %s108 = smul.addr %s107, 2
        %s109 = smul.addr %s108, 8
        %s110 = scalar_lea.vmem %s0, %s109
      $region24: #{tpu_custom_call.1} parent=19 // pred_fallthru
        _
    $region20: #{tpu_custom_call.1} parent=5 // pred_fallthru
      _
    %p111 = scmp.le.s32.totalorder 1, %s8
    %p112 = scmp.lt.s32.totalorder %s8, 3
    %p113 = pnand %p111, %p112
    %p114 = pneg %p113
    // Predicated region
    $region25: #{tpu_custom_call.1} parent=5 // pred_check
      _
    $region26: #{tpu_custom_call.1} parent=5 // pred_check_branch
      %116 = sbr.rel (%p113) target = $region28
    $region27: #{tpu_custom_call.1} parent=5 // pred_region
      %s117 = ssub.s32 %s8, 1
      %p118 = scmp.lt.s32.totalorder %s13, 1
      %s119 = scalar_select %p118, %s13, 1
      %s120 = smul.addr %s119, 2
      %s121 = smul.addr %s120, 8
      %s122 = scalar_lea.vmem %s0, %s121
      %p123 = pneg %p34
      %p124 = pneg %p31
      %p125 = pneg %p55
      %p126 = pneg %p52
      %p127 = pneg %p81
      %p128 = pneg %p78
      %p129 = scmp.lt.s32.totalorder %s13, 1
      %s130 = scalar_select %p129, %s13, 1
      %s131 = smul.addr %s130, 4
      %s132 = smul.addr %s131, 8
      %s133 = scalar_lea.vmem %s2, %s132
      %p134 = scmp.lt.s32.totalorder %s13, 1
      %s135 = scalar_select %p134, %s13, 1
      %s136 = smul.addr %s135, 2
      %s137 = smul.addr %s136, 8
      %s138 = scalar_lea.vmem %s0, %s137
      %p139 = scmp.lt.s32.totalorder %s13, 1
      %s140 = scalar_select %p139, %s13, 1
      %s141 = smul.addr %s140, 4
      %s142 = smul.addr %s141, 8
      %s143 = scalar_lea.vmem %s2, %s142
      %v145 = vld [vmem:[%s138] sm:$0xff]
      %v146 = vld [vmem:[%s138 + $0x8] sm:$0xff]
      %v147 = vpack.c.bf16 %v146, %v145
      %v148 = vld [vmem:[%s1] sm:$0xf]
      %v149 = vld [vmem:[%s1 + $0x4] sm:$0xf]
      %v150 = vld [vmem:[%s1 + $0x8] sm:$0xf]
      %v151 = vld [vmem:[%s1 + $0xc] sm:$0xf]
      %v152 = vld [vmem:[%s1 + $0x10] sm:$0xf]
      %v153 = vld [vmem:[%s1 + $0x14] sm:$0xf]
      %v154 = vld [vmem:[%s1 + $0x18] sm:$0xf]
      %v155 = vld [vmem:[%s1 + $0x1c] sm:$0xf]
      %v156 = vld [vmem:[%s1 + $0x20] sm:$0xf]
      %v157 = vld [vmem:[%s1 + $0x24] sm:$0xf]
      %v158 = vld [vmem:[%s1 + $0x28] sm:$0xf]
      %v159 = vld [vmem:[%s1 + $0x2c] sm:$0xf]
      %v160 = vld [vmem:[%s1 + $0x30] sm:$0xf]
      %v161 = vld [vmem:[%s1 + $0x34] sm:$0xf]
      %v162 = vld [vmem:[%s1 + $0x38] sm:$0xf]
      %v163 = vld [vmem:[%s1 + $0x3c] sm:$0xf]
      %v180 = vunpack.c.l.b16 %v148
      %v181 = vunpack.c.l.b16 %v149
      %v182 = vunpack.c.l.b16 %v150
      %v183 = vunpack.c.l.b16 %v151
      %v184 = vunpack.c.l.b16 %v152
      %v185 = vunpack.c.l.b16 %v153
      %v186 = vunpack.c.l.b16 %v154
      %v187 = vunpack.c.l.b16 %v155
      %v188 = vunpack.c.l.b16 %v156
      %v189 = vunpack.c.l.b16 %v157
      %v190 = vunpack.c.l.b16 %v158
      %v191 = vunpack.c.l.b16 %v159
      %v192 = vunpack.c.l.b16 %v160
      %v193 = vunpack.c.l.b16 %v161
      %v194 = vunpack.c.l.b16 %v162
      %v195 = vunpack.c.l.b16 %v163
      %v196 = vpack.c.b16 %v181, %v180
      %v197 = vpack.c.b16 %v183, %v182
      %v198 = vpack.c.b16 %v185, %v184
      %v199 = vpack.c.b16 %v187, %v186
      %v200 = vpack.c.b16 %v189, %v188
      %v201 = vpack.c.b16 %v191, %v190
      %v202 = vpack.c.b16 %v193, %v192
      %v203 = vpack.c.b16 %v195, %v194
      %212 = vmatprep.subr.bf16.mxu0 0
      %213 = vmatpush1.bf16.msra.mxu0 %v196
      %214 = vmatprep.subr.bf16.mxu0 0
      %215 = vmatpush1.bf16.msra.mxu0 %v197
      %216 = vmatprep.subr.bf16.mxu0 0
      %217 = vmatpush1.bf16.msra.mxu0 %v198
      %218 = vmatprep.subr.bf16.mxu0 0
      %219 = vmatpush1.bf16.msra.mxu0 %v199
      %220 = vmatprep.subr.bf16.mxu0 0
      %221 = vmatpush1.bf16.msra.mxu0 %v200
      %222 = vmatprep.subr.bf16.mxu0 0
      %223 = vmatpush1.bf16.msra.mxu0 %v201
      %224 = vmatprep.subr.bf16.mxu0 0
      %225 = vmatpush1.bf16.msra.mxu0 %v202
      %226 = vmatprep.subr.bf16.mxu0 0
      %227 = vmatpush1.bf16.msra.mxu0 %v203
      %228 = vmatprep.subr.bf16.mxu0 0
      %229 = vmatpush1.bf16.msra.mxu0 0
      %230 = vmatprep.subr.bf16.mxu0 0
      %231 = vmatpush1.bf16.msra.mxu0 0
      %232 = vmatprep.subr.bf16.mxu0 0
      %233 = vmatpush1.bf16.msra.mxu0 0
      %234 = vmatprep.subr.bf16.mxu0 0
      %235 = vmatpush1.bf16.msra.mxu0 0
      %236 = vmatprep.subr.bf16.mxu0 0
      %237 = vmatpush1.bf16.msra.mxu0 0
      %238 = vmatprep.subr.bf16.mxu0 0
      %239 = vmatpush1.bf16.msra.mxu0 0
      %240 = vmatprep.subr.bf16.mxu0 0
      %241 = vmatpush1.bf16.msra.mxu0 0
      %242 = vmatprep.subr.bf16.mxu0 0
      %243 = vmatpush1.bf16.msra.mxu0 0
      %244 = vmatprep.mubr.bf16.mxu0 0
      %245 = vmatmul.mubr.bf16.gmra.mrb[0].mxu0 %v147
      %v246 = vpop.f32.mrb[0].mxu0
      %v247 = vadd.f32 0.0, %v246
      %v248 = vpop.f32.mrb[0].mxu0
      %v249 = vpop.f32.mrb[0].mxu0
      %v250 = vadd.f32 0.0, %v249
      %v251 = vpop.f32.mrb[0].mxu0
      %252 = vdwg.mxu0
      %v253 = vmul.f32 %v247, 0.088388346
      %v254 = vmul.f32 %v250, 0.088388346
      %v255 = vpack.c.bf16 %v254, %v253
      %v256 = vpack.c.bf16 %v250, %v247
      %258 = vrot.lane.b32.xlu0 %v256, 96
      %v259 = vpop.permute.xlu0 %258
      %vm260 = vcmask 261120
      %v262 = vsel %vm260, %v255, 0
      %v265 = vsel %vm260, %v259, 0
      %267 = vmatprep.subr.bf16.mxu0 0
      %268 = vmatpush1.bf16.xpose.msra.mxu0 %v265
      %269 = vmatprep.subr.bf16.mxu0 0
      %270 = vmatpush1.bf16.xpose.msra.mxu0 0
      %271 = vmatprep.subr.bf16.mxu0 0
      %272 = vmatpush1.bf16.xpose.msra.mxu0 0
      %273 = vmatprep.subr.bf16.mxu0 0
      %274 = vmatpush1.bf16.xpose.msra.mxu0 0
      %275 = vmatprep.subr.bf16.mxu0 0
      %276 = vmatpush1.bf16.xpose.msra.mxu0 0
      %277 = vmatprep.subr.bf16.mxu0 0
      %278 = vmatpush1.bf16.xpose.msra.mxu0 0
      %279 = vmatprep.subr.bf16.mxu0 0
      %280 = vmatpush1.bf16.xpose.msra.mxu0 0
      %281 = vmatprep.subr.bf16.mxu0 0
      %282 = vmatpush1.bf16.xpose.msra.mxu0 0
      %283 = vmatprep.subr.bf16.mxu0 0
      %284 = vmatpush1.bf16.xpose.msra.mxu0 0
      %285 = vmatprep.subr.bf16.mxu0 0
      %286 = vmatpush1.bf16.xpose.msra.mxu0 0
      %287 = vmatprep.subr.bf16.mxu0 0
      %288 = vmatpush1.bf16.xpose.msra.mxu0 0
      %289 = vmatprep.subr.bf16.mxu0 0
      %290 = vmatpush1.bf16.xpose.msra.mxu0 0
      %291 = vmatprep.subr.bf16.mxu0 0
      %292 = vmatpush1.bf16.xpose.msra.mxu0 0
      %293 = vmatprep.subr.bf16.mxu0 0
      %294 = vmatpush1.bf16.xpose.msra.mxu0 0
      %295 = vmatprep.subr.bf16.mxu0 0
      %296 = vmatpush1.bf16.xpose.msra.mxu0 0
      %297 = vmatprep.subr.bf16.mxu0 0
      %298 = vmatpush1.bf16.xpose.msra.mxu0 0
      %299 = vmatprep.mubr.bf16.mxu0 0
      %300 = vmatmul.mubr.bf16.gmra.mrb[0].mxu0 %v262
      %v301 = vpop.f32.mrb[0].mxu0
      %v302 = vadd.f32 0.0, %v301
      %v303 = vpop.f32.mrb[0].mxu0
      %v304 = vpop.f32.mrb[0].mxu0
      %v305 = vadd.f32 0.0, %v304
      %v306 = vpop.f32.mrb[0].mxu0
      %307 = vdwg.mxu0
      %v308 = vlaneseq
      %v309 = vshrl.u32 %v308, 7
      %v310 = vadd.s32 %v309, 8
      %v311 = vlaneseq
      %v312 = vand.u32 %v311, 127
      %vm313 = vcmp.le.s32.totalorder %v312, %v309
      %vm314 = vcmp.le.s32.totalorder %v312, %v310
      %v315 = vsel %vm313, %v302, -inf
      %v316 = vsel %vm314, %v305, -inf
      %vm317 = vcmask 130048
      %v318 = vsel %vm317, %v315, -inf
      %319 = vmax.xlane.f32.xlu0 %v318
      %v320 = vpop.xlane.xlu0 %319
      %v321 = vsel %vm317, %v316, -inf
      %322 = vmax.xlane.f32.xlu0 %v321
      %v323 = vpop.xlane.xlu0 %322
      %v324 = vsub.f32 %v315, %v320
      %v325 = vsub.f32 %v316, %v323
      %v326 = vmul.f32 %v324, 1.442695
      %v327 = vpow.pop %v326
      %v328 = vmul.f32 %v325, 1.442695
      %v329 = vpow.pop %v328
      %v330 = vsel %vm317, %v327, 0.0
      %331 = vadd.xlane.f32.xlu0 %v330
      %v332 = vpop.xlane.xlu0 %331
      %v333 = vsel %vm317, %v329, 0.0
      %334 = vadd.xlane.f32.xlu0 %v333
      %v335 = vpop.xlane.xlu0 %334
      %v336 = vrcp.pop %v332
      %v337 = vrcp.pop %v335
      %v338 = vmul.f32 %v327, %v336
      %v339 = vmul.f32 %v329, %v337
      %v340 = vpack.c.bf16 %v339, %v338
      %341 = vrot.lane.b32.xlu0 %v256, 64
      %v342 = vpop.permute.xlu0 %341
      %344 = vxpose.xlu0.c.b16.start [1/8] %v342, 128
      %345 = vxpose.xlu0.c.b16.cont [2/8] 0, 128
      %346 = vxpose.xlu0.c.b16.cont [3/8] 0, 128
      %347 = vxpose.xlu0.c.b16.cont [4/8] 0, 128
      %348 = vxpose.xlu0.c.b16.cont [5/8] 0, 128
      %349 = vxpose.xlu0.c.b16.cont [6/8] 0, 128
      %350 = vxpose.xlu0.c.b16.cont [7/8] 0, 128
      %351 = vxpose.xlu0.c.b16.end [8/8] 0, 128
      %v352 = vpop.trf.xlu0
      %v353 = vpop.trf.xlu0
      %v354 = vpop.trf.xlu0
      %v355 = vpop.trf.xlu0
      %v356 = vpop.trf.xlu0
      %v357 = vpop.trf.xlu0
      %v358 = vpop.trf.xlu0
      %v359 = vpop.trf.xlu0
      %v361 = vsel %vm317, %v352, 0
      %v364 = vsel %vm317, %v353, 0
      %v367 = vsel %vm317, %v340, 0
      %369 = vmatprep.subr.bf16.mxu0 0
      %370 = vmatpush1.bf16.xpose.msra.mxu0 %v367
      %371 = vmatprep.subr.bf16.mxu0 0
      %372 = vmatpush1.bf16.xpose.msra.mxu0 0
      %373 = vmatprep.subr.bf16.mxu0 0
      %374 = vmatpush1.bf16.xpose.msra.mxu0 0
      %375 = vmatprep.subr.bf16.mxu0 0
      %376 = vmatpush1.bf16.xpose.msra.mxu0 0
      %377 = vmatprep.subr.bf16.mxu0 0
      %378 = vmatpush1.bf16.xpose.msra.mxu0 0
      %379 = vmatprep.subr.bf16.mxu0 0
      %380 = vmatpush1.bf16.xpose.msra.mxu0 0
      %381 = vmatprep.subr.bf16.mxu0 0
      %382 = vmatpush1.bf16.xpose.msra.mxu0 0
      %383 = vmatprep.subr.bf16.mxu0 0
      %384 = vmatpush1.bf16.xpose.msra.mxu0 0
      %385 = vmatprep.subr.bf16.mxu0 0
      %386 = vmatpush1.bf16.xpose.msra.mxu0 0
      %387 = vmatprep.subr.bf16.mxu0 0
      %388 = vmatpush1.bf16.xpose.msra.mxu0 0
      %389 = vmatprep.subr.bf16.mxu0 0
      %390 = vmatpush1.bf16.xpose.msra.mxu0 0
      %391 = vmatprep.subr.bf16.mxu0 0
      %392 = vmatpush1.bf16.xpose.msra.mxu0 0
      %393 = vmatprep.subr.bf16.mxu0 0
      %394 = vmatpush1.bf16.xpose.msra.mxu0 0
      %395 = vmatprep.subr.bf16.mxu0 0
      %396 = vmatpush1.bf16.xpose.msra.mxu0 0
      %397 = vmatprep.subr.bf16.mxu0 0
      %398 = vmatpush1.bf16.xpose.msra.mxu0 0
      %399 = vmatprep.subr.bf16.mxu0 0
      %400 = vmatpush1.bf16.xpose.msra.mxu0 0
      %401 = vmatprep.mubr.bf16.mxu0 0
      %402 = vmatmul.mubr.bf16.gmra.mrb[0].mxu0 %v361
      %v403 = vpop.f32.mrb[0].mxu0
      %v404 = vadd.f32 0.0, %v403
      %v405 = vpop.f32.mrb[0].mxu0
      %v406 = vpop.f32.mrb[0].mxu0
      %v407 = vadd.f32 0.0, %v406
      %v408 = vpop.f32.mrb[0].mxu0
      %409 = vmatprep.mubr.bf16.mxu0 0
      %410 = vmatmul.mubr.bf16.gmra.mrb[0].mxu0 %v364
      %v411 = vpop.f32.mrb[0].mxu0
      %v412 = vadd.f32 0.0, %v411
      %v413 = vpop.f32.mrb[0].mxu0
      %v414 = vpop.f32.mrb[0].mxu0
      %v415 = vadd.f32 0.0, %v414
      %v416 = vpop.f32.mrb[0].mxu0
      %417 = vdwg.mxu0
      %418 = vst.msk [vmem:[%s143] sm:$0xff] %vm317, %v404
      %419 = vst.msk [vmem:[%s143 + $0x8] sm:$0xff] %vm317, %v407
      %420 = vst.msk [vmem:[%s143 + $0x10] sm:$0xff] %vm317, %v412
      %421 = vst.msk [vmem:[%s143 + $0x18] sm:$0xff] %vm317, %v415
      %p422 = scmp.lt.s32.totalorder %s13, 1
      %s423 = scalar_select %p422, %s13, 1
      %s424 = smul.addr %s423, 4
      %s425 = smul.addr %s424, 8
      %s426 = scalar_lea.vmem %s2, %s425
      // Predicated region
      $region29: #{tpu_custom_call.1} parent=27 // pred_check
        %p427 = pneg %p78
      $region30: #{tpu_custom_call.1} parent=27 // pred_check_branch
        %429 = sbr.rel (%p427) target = $region32
      $region31: #{tpu_custom_call.1} parent=27 // pred_region
        _
      $region32: #{tpu_custom_call.1} parent=27 // pred_fallthru
        _
    $region28: #{tpu_custom_call.1} parent=5 // pred_fallthru
      _
    %p430 = scmp.le.s32.totalorder 2, %s8
    // Predicated region
    $region33: #{tpu_custom_call.1} parent=5 // pred_check
      %p431 = pneg %p430
    $region34: #{tpu_custom_call.1} parent=5 // pred_check_branch
      %433 = sbr.rel (%p431) target = $region36
    $region35: #{tpu_custom_call.1} parent=5 // pred_region
      %s434 = ssub.s32 %s8, 2
      // Predicated region
      $region37: #{tpu_custom_call.1} parent=35 // pred_check
        %p435 = pneg %p84
      $region38: #{tpu_custom_call.1} parent=35 // pred_check_branch
        %437 = sbr.rel (%p435) target = $region40
      $region39: #{tpu_custom_call.1} parent=35 // pred_region
        %p438 = scmp.lt.s32.totalorder %s14, 1
        %s439 = scalar_select %p438, %s14, 1
        %s440 = smul.addr %s439, 4
        %s441 = smul.addr %s440, 8
        %s442 = scalar_lea.vmem %s2, %s441
      $region40: #{tpu_custom_call.1} parent=35 // pred_fallthru
        _
    $region36: #{tpu_custom_call.1} parent=5 // pred_fallthru
      _
  $region6: #{tpu_custom_call.1} parent=0 // loop_footer
    %s12 = sadd.s32 1, %s8
  $region7: #{tpu_custom_call.1} parent=0 // loop_footer_branch
    %7 = sbr.rel target = $region3
  $region8: #{tpu_custom_call.1} parent=0 // loop_exit
    _

</llo_original>
